<compile_context>
chip_gen: v7x
topology: tpu7x:2x2x1
jax: 0.10.0
libtpu: 0.0.40
codegen_flags: <defaults>
</compile_context>

<pallas_src>
import functools
import math

import jax
import jax.numpy as jnp
from jax import lax
from jax.experimental import pallas as pl
from jax.experimental.pallas import tpu as pltpu


# Flip to jnp.bfloat16 on v6e/v7x for ~2x MXU throughput; kept f32 so the
# correctness check stays tight. Biases / ReLU / accumulation are f32 always.
COMPUTE_DTYPE = jnp.float32


def _round_up(x, m):
    return ((x + m - 1) // m) * m


# ----------------------------------------------------------------------------
# Pallas kernels
# ----------------------------------------------------------------------------
def _fused_two_conv_kernel(x_ref, w1_ref, b1_ref, w2_ref, b2_ref, o_ref, *,
                           use_vpu_1x1):
    # x_ref : (K1, M)   im2col slab of ONE batch element, M = H*W (lane axis)
    # w1_ref: (C1, K1)  3x3 dilated conv weights, K1 = 9*Cin
    # b1_ref: (C1, 1)   f32
    # w2_ref: (C2p, C1) 1x1 conv weights, Cout zero-padded to sublane multiple
    # b2_ref: (C2p, 1)  f32
    # o_ref : (C2p, M)
    a = jnp.dot(w1_ref[...], x_ref[...], preferred_element_type=jnp.float32)
    a = jnp.maximum(a + b1_ref[...], 0.0)               # (C1, M) f32, VPU
    if use_vpu_1x1:
        # K=C1, Cout=C2p fill <5% of an MXU pass: do the 1x1 conv as C1
        # broadcast FMAs on the VPU instead (frees the MXU slot / MRF drain).
        w2 = w2_ref[...].astype(jnp.float32)             # (C2p, C1)
        c1 = a.shape[0]
        y = w2[:, 0:1] * a[0:1, :]
        for c in range(1, c1):                           # static unroll
            y = y + w2[:, c:c + 1] * a[c:c + 1, :]
        y = y + b2_ref[...]
    else:
        y = jnp.dot(w2_ref[...], a.astype(w2_ref.dtype),
                    preferred_element_type=jnp.float32) + b2_ref[...]
    o_ref[...] = y.astype(o_ref.dtype)


def _conv_matmul_kernel(x_ref, w_ref, b_ref, o_ref, *, apply_relu):
    # Generic single conv-as-matmul (only used by the generic layer loop).
    y = jnp.dot(w_ref[...], x_ref[...], preferred_element_type=jnp.float32)
    y = y + b_ref[...]
    if apply_relu:
        y = jnp.maximum(y, 0.0)
    o_ref[...] = y.astype(o_ref.dtype)


# ----------------------------------------------------------------------------
# Glue: per-batch im2col (no N<->C transpose; spatial stays on the lane axis)
# ----------------------------------------------------------------------------
def _im2col_per_batch(x, ksize, dilation):
    """(N, C, H, W) -> (N, ksize*ksize*C, H*W), tap-major / channel-minor."""
    N, C, H, W = x.shape
    pad = dilation if ksize == 3 else 0   # module uses padding=dilation for 3x3
    xp = jnp.pad(x, ((0, 0), (0, 0), (pad, pad), (pad, pad)))
    taps = []
    for kh in range(ksize):
        for kw in range(ksize):
            taps.append(xp[:, :, kh * dilation:kh * dilation + H,
                           kw * dilation:kw * dilation + W])
    t = jnp.stack(taps, axis=1)                      # (N, T, C, H, W)
    return t.reshape(N, ksize * ksize * C, H * W)    # contiguous merge only


def _weights_as_matrix(w_oihw):
    """(Cout, Cin, kh, kw) -> (Cout, kh*kw*Cin), matching the im2col order."""
    Cout, Cin, kh, kw = w_oihw.shape
    return jnp.transpose(w_oihw, (0, 2, 3, 1)).reshape(Cout, kh * kw * Cin)


# ----------------------------------------------------------------------------
# Pallas-backed convs
# ----------------------------------------------------------------------------
def fused_conv3x3_relu_conv1x1(x, w1, b1, w2, b2, dilation):
    """conv3x3(dilated)+bias+ReLU+conv1x1+bias in ONE pallas_call, grid=(N,)."""
    N, Cin, H, W = x.shape
    C1 = w1.shape[0]
    C2 = w2.shape[0]
    M = H * W
    K1 = 9 * Cin
    C2p = _round_up(C2, 8)
    isz = jnp.dtype(COMPUTE_DTYPE).itemsize

    xi = _im2col_per_batch(x, 3, dilation).astype(COMPUTE_DTYPE)      # (N,K1,M)
    w1m = _weights_as_matrix(w1).astype(COMPUTE_DTYPE)                # (C1,K1)
    w2m = jnp.pad(w2.reshape(C2, C1),
                  ((0, C2p - C2), (0, 0))).astype(COMPUTE_DTYPE)      # (C2p,C1)
    b1m = b1.reshape(C1, 1).astype(jnp.float32)
    b2m = jnp.pad(b2, (0, C2p - C2)).reshape(C2p, 1).astype(jnp.float32)

    kernel = functools.partial(_fused_two_conv_kernel, use_vpu_1x1=(C1 <= 16))
    y = pl.pallas_call(
        kernel,
        out_shape=jax.ShapeDtypeStruct((N, C2p, M), jnp.float32),
        grid_spec=pl.GridSpec(
            grid=(N,),
            in_specs=[pl.BlockSpec((None, K1, M), lambda n: (n, 0, 0)),
                      pl.BlockSpec((C1, K1), lambda n: (0, 0)),
                      pl.BlockSpec((C1, 1), lambda n: (0, 0)),
                      pl.BlockSpec((C2p, C1), lambda n: (0, 0)),
                      pl.BlockSpec((C2p, 1), lambda n: (0, 0))],
            out_specs=pl.BlockSpec((None, C2p, M), lambda n: (n, 0, 0))),
        cost_estimate=pl.CostEstimate(
            flops=2 * N * M * (C1 * K1 + C2p * C1),
            transcendentals=0,
            bytes_accessed=(isz * N * K1 * M + isz * (C1 * K1 + C2p * C1)
                            + 4 * (C1 + C2p) + 4 * N * C2p * M)),
        compiler_params=pltpu.CompilerParams(
            dimension_semantics=("parallel",)),
    )(xi, w1m, b1m, w2m, b2m)
    # Drop the zero channel padding; no transposes needed.
    return y.reshape(N, C2p, H, W)[:, :C2]


def conv2d_pallas(x, w, b, dilation, apply_relu):
    """Single conv (+optional ReLU) as one lane-dense matmul per batch elem."""
    N, Cin, H, W = x.shape
    Cout = w.shape[0]
    k = w.shape[2]
    M = H * W
    K = k * k * Cin
    Coutp = _round_up(Cout, 8)
    isz = jnp.dtype(COMPUTE_DTYPE).itemsize

    xi = _im2col_per_batch(x, k, dilation).astype(COMPUTE_DTYPE)      # (N,K,M)
    wm = jnp.pad(_weights_as_matrix(w),
                 ((0, Coutp - Cout), (0, 0))).astype(COMPUTE_DTYPE)   # (Coutp,K)
    bm = jnp.pad(b, (0, Coutp - Cout)).reshape(Coutp, 1).astype(jnp.float32)

    kernel = functools.partial(_conv_matmul_kernel, apply_relu=apply_relu)
    y = pl.pallas_call(
        kernel,
        out_shape=jax.ShapeDtypeStruct((N, Coutp, M), jnp.float32),
        grid_spec=pl.GridSpec(
            grid=(N,),
            in_specs=[pl.BlockSpec((None, K, M), lambda n: (n, 0, 0)),
                      pl.BlockSpec((Coutp, K), lambda n: (0, 0)),
                      pl.BlockSpec((Coutp, 1), lambda n: (0, 0))],
            out_specs=pl.BlockSpec((None, Coutp, M), lambda n: (n, 0, 0))),
        cost_estimate=pl.CostEstimate(
            flops=2 * N * M * K * Coutp,
            transcendentals=0,
            bytes_accessed=(isz * N * K * M + isz * Coutp * K
                            + 4 * Coutp + 4 * N * Coutp * M)),
        compiler_params=pltpu.CompilerParams(
            dimension_semantics=("parallel",)),
    )(xi, wm, bm)
    return y.reshape(N, Coutp, H, W)[:, :Cout]


# ----------------------------------------------------------------------------
# MSDNet (forward semantics identical to the PyTorch module)
# ----------------------------------------------------------------------------
class MSDNetPallas:
    def __init__(self, in_channels, out_channels, num_layers, num_features,
                 dilations, key):
        self.num_layers = num_layers
        self.dilations = dilations
        self.weights, self.biases = [], []
        keys = jax.random.split(key, 2 * (num_layers + 1))
        for i in range(num_layers):
            cin_i = in_channels if i == 0 else num_features * (i + 1)
            bound = 1.0 / math.sqrt(cin_i * 9)
            w = jax.random.uniform(keys[2 * i], (num_features, cin_i, 3, 3),
                                   jnp.float32, -bound, bound)
            b = jax.random.uniform(keys[2 * i + 1], (num_features,),
                                   jnp.float32, -bound, bound)
            self.weights.append(w)
            self.biases.append(b)
        cin_o = num_features * num_layers
        bound = 1.0 / math.sqrt(cin_o)
        self.w_out = jax.random.uniform(keys[-2], (out_channels, cin_o, 1, 1),
                                        jnp.float32, -bound, bound)
        self.b_out = jax.random.uniform(keys[-1], (out_channels,),
                                        jnp.float32, -bound, bound)

    def __call__(self, x):
        if self.num_layers == 1:
            # outputs=[x]; cat([x])==x; conv3x3+relu; cat([out1])==out1; conv1x1
            # -> exactly the fused kernel.
            return fused_conv3x3_relu_conv1x1(
                x, self.weights[0], self.biases[0],
                self.w_out, self.b_out, self.dilations[0])
        # Generic path, faithful to the PyTorch forward. NOTE: effectively
        # unreachable — the original module concatenates along dim=0 (batch)
        # while its conv layers expect num_features*(i+1) input channels, so
        # any num_layers >= 2 config raises the same shape error in PyTorch.
        outputs = [x]
        for i in range(self.num_layers):
            out = jnp.concatenate(outputs, axis=0)
            out = conv2d_pallas(out, self.weights[i], self.biases[i],
                                self.dilations[i], apply_relu=True)
            outputs.append(out)
        out = jnp.concatenate(outputs[1:], axis=0)
        return conv2d_pallas(out, self.w_out, self.b_out, 1, apply_relu=False)


# ----------------------------------------------------------------------------
# Pure-JAX reference (lax.conv_general_dilated) for correctness checking
# ----------------------------------------------------------------------------
def _conv_ref(x, w, b, dilation):
    k = w.shape[2]
    pad = dilation if k == 3 else 0
    y = lax.conv_general_dilated(
        x, w, window_strides=(1, 1),
        padding=[(pad, pad), (pad, pad)],
        rhs_dilation=(dilation, dilation),
        dimension_numbers=("NCHW", "OIHW", "NCHW"))
    return y + b[None, :, None, None]


def msdnet_reference(x, model):
    outputs = [x]
    for i in range(model.num_layers):
        out = jnp.concatenate(outputs, axis=0)
        out = _conv_ref(out, model.weights[i], model.biases[i],
                        model.dilations[i])
        out = jnp.maximum(out, 0.0)
        outputs.append(out)
    out = jnp.concatenate(outputs[1:], axis=0)
    return _conv_ref(out, model.w_out, model.b_out, 1)


# ----------------------------------------------------------------------------
if __name__ == "__main__":
    key = jax.random.PRNGKey(0)
    kx, kp = jax.random.split(key)

    N, C_IN, H, W = 2, 4, 16, 16
    NUM_LAYERS = 1          # only well-formed config given dim=0 concatenation
    NUM_FEATURES = 8
    OUT_CHANNELS = 3
    DILATIONS = [2]

    x = jax.random.normal(kx, (N, C_IN, H, W), jnp.float32)
    model = MSDNetPallas(C_IN, OUT_CHANNELS, NUM_LAYERS, NUM_FEATURES,
                         DILATIONS, kp)

    fwd = jax.jit(lambda inp: model(inp))
    y = jax.block_until_ready(fwd(x))

    y_ref = msdnet_reference(x, model)
    assert y.shape == (N, OUT_CHANNELS, H, W), y.shape
    tol = 1e-4 if COMPUTE_DTYPE == jnp.float32 else 2e-2
    err = float(jnp.max(jnp.abs(y - y_ref)))
    assert err < tol, f"max abs error {err} (tol {tol})"

    print("KERNEL_OK")
</pallas_src>

<mosaic_0001>
module attributes {stable_mosaic.version = 11 : i64} {
  func.func @_fused_two_conv_kernel(%arg0: i32, %arg1: memref<1x36x256xf32, #tpu.memory_space<vmem>>, %arg2: memref<8x36xf32, #tpu.memory_space<vmem>>, %arg3: memref<8x1xf32, #tpu.memory_space<vmem>>, %arg4: memref<8x8xf32, #tpu.memory_space<vmem>>, %arg5: memref<8x1xf32, #tpu.memory_space<vmem>>, %arg6: memref<1x8x256xf32, #tpu.memory_space<vmem>>) attributes {dimension_semantics = [#tpu.dimension_semantics<parallel>], iteration_bounds = array<i64: 2>, scalar_prefetch = 0 : i64, scratch_operands = 0 : i64, tpu.core_type = #tpu.core_type<tc>, window_params = [{transform_indices = @transform_0, window_bounds = array<i64: 1, 36, 256>}, {pipeline_mode = #tpu.pipeline_mode<synchronous>, transform_indices = @transform_1, window_bounds = array<i64: 8, 36>}, {pipeline_mode = #tpu.pipeline_mode<synchronous>, transform_indices = @transform_2, window_bounds = array<i64: 8, 1>}, {pipeline_mode = #tpu.pipeline_mode<synchronous>, transform_indices = @transform_3, window_bounds = array<i64: 8, 8>}, {pipeline_mode = #tpu.pipeline_mode<synchronous>, transform_indices = @transform_4, window_bounds = array<i64: 8, 1>}, {transform_indices = @transform_5, window_bounds = array<i64: 1, 8, 256>}]} {
    %c0 = arith.constant 0 : index
    %c0_0 = arith.constant 0 : index
    %0 = vector.load %arg2[%c0, %c0_0] : memref<8x36xf32, #tpu.memory_space<vmem>>, vector<8x36xf32>
    %c0_1 = arith.constant 0 : index
    %c0_2 = arith.constant 0 : index
    %c0_3 = arith.constant 0 : index
    %1 = vector.load %arg1[%c0_1, %c0_2, %c0_3] : memref<1x36x256xf32, #tpu.memory_space<vmem>>, vector<1x36x256xf32>
    %2 = vector.shape_cast %1 : vector<1x36x256xf32> to vector<36x256xf32>
    %cst = arith.constant dense<0.000000e+00> : vector<8x256xf32>
    %3 = tpu.matmul %0, %2, %cst {dimension_numbers = #tpu.dot_dimension_numbers<[1], [0], [0], [1], [0, 0, 1, 1], [], []>} : vector<8x36xf32>, vector<36x256xf32>, vector<8x256xf32> -> vector<8x256xf32>
    %c0_4 = arith.constant 0 : index
    %c0_5 = arith.constant 0 : index
    %4 = vector.load %arg3[%c0_4, %c0_5] : memref<8x1xf32, #tpu.memory_space<vmem>>, vector<8x1xf32>
    %5 = vector.broadcast %4 : vector<8x1xf32> to vector<8x256xf32>
    %6 = arith.addf %3, %5 : vector<8x256xf32>
    %cst_6 = arith.constant 0.000000e+00 : f32
    %7 = vector.broadcast %cst_6 : f32 to vector<8x256xf32>
    %8 = arith.maximumf %6, %7 : vector<8x256xf32>
    %c0_7 = arith.constant 0 : index
    %c0_8 = arith.constant 0 : index
    %9 = vector.load %arg4[%c0_7, %c0_8] : memref<8x8xf32, #tpu.memory_space<vmem>>, vector<8x8xf32>
    %10 = vector.extract_strided_slice %9 {offsets = [0, 0], sizes = [8, 1], strides = [1, 1]} : vector<8x8xf32> to vector<8x1xf32>
    %11 = vector.extract_strided_slice %8 {offsets = [0, 0], sizes = [1, 256], strides = [1, 1]} : vector<8x256xf32> to vector<1x256xf32>
    %12 = vector.broadcast %10 : vector<8x1xf32> to vector<8x256xf32>
    %13 = vector.broadcast %11 : vector<1x256xf32> to vector<8x256xf32>
    %14 = arith.mulf %12, %13 : vector<8x256xf32>
    %15 = vector.extract_strided_slice %9 {offsets = [0, 1], sizes = [8, 1], strides = [1, 1]} : vector<8x8xf32> to vector<8x1xf32>
    %16 = vector.extract_strided_slice %8 {offsets = [1, 0], sizes = [1, 256], strides = [1, 1]} : vector<8x256xf32> to vector<1x256xf32>
    %17 = vector.broadcast %15 : vector<8x1xf32> to vector<8x256xf32>
    %18 = vector.broadcast %16 : vector<1x256xf32> to vector<8x256xf32>
    %19 = arith.mulf %17, %18 : vector<8x256xf32>
    %20 = arith.addf %14, %19 : vector<8x256xf32>
    %21 = vector.extract_strided_slice %9 {offsets = [0, 2], sizes = [8, 1], strides = [1, 1]} : vector<8x8xf32> to vector<8x1xf32>
    %22 = vector.extract_strided_slice %8 {offsets = [2, 0], sizes = [1, 256], strides = [1, 1]} : vector<8x256xf32> to vector<1x256xf32>
    %23 = vector.broadcast %21 : vector<8x1xf32> to vector<8x256xf32>
    %24 = vector.broadcast %22 : vector<1x256xf32> to vector<8x256xf32>
    %25 = arith.mulf %23, %24 : vector<8x256xf32>
    %26 = arith.addf %20, %25 : vector<8x256xf32>
    %27 = vector.extract_strided_slice %9 {offsets = [0, 3], sizes = [8, 1], strides = [1, 1]} : vector<8x8xf32> to vector<8x1xf32>
    %28 = vector.extract_strided_slice %8 {offsets = [3, 0], sizes = [1, 256], strides = [1, 1]} : vector<8x256xf32> to vector<1x256xf32>
    %29 = vector.broadcast %27 : vector<8x1xf32> to vector<8x256xf32>
    %30 = vector.broadcast %28 : vector<1x256xf32> to vector<8x256xf32>
    %31 = arith.mulf %29, %30 : vector<8x256xf32>
    %32 = arith.addf %26, %31 : vector<8x256xf32>
    %33 = vector.extract_strided_slice %9 {offsets = [0, 4], sizes = [8, 1], strides = [1, 1]} : vector<8x8xf32> to vector<8x1xf32>
    %34 = vector.extract_strided_slice %8 {offsets = [4, 0], sizes = [1, 256], strides = [1, 1]} : vector<8x256xf32> to vector<1x256xf32>
    %35 = vector.broadcast %33 : vector<8x1xf32> to vector<8x256xf32>
    %36 = vector.broadcast %34 : vector<1x256xf32> to vector<8x256xf32>
    %37 = arith.mulf %35, %36 : vector<8x256xf32>
    %38 = arith.addf %32, %37 : vector<8x256xf32>
    %39 = vector.extract_strided_slice %9 {offsets = [0, 5], sizes = [8, 1], strides = [1, 1]} : vector<8x8xf32> to vector<8x1xf32>
    %40 = vector.extract_strided_slice %8 {offsets = [5, 0], sizes = [1, 256], strides = [1, 1]} : vector<8x256xf32> to vector<1x256xf32>
    %41 = vector.broadcast %39 : vector<8x1xf32> to vector<8x256xf32>
    %42 = vector.broadcast %40 : vector<1x256xf32> to vector<8x256xf32>
    %43 = arith.mulf %41, %42 : vector<8x256xf32>
    %44 = arith.addf %38, %43 : vector<8x256xf32>
    %45 = vector.extract_strided_slice %9 {offsets = [0, 6], sizes = [8, 1], strides = [1, 1]} : vector<8x8xf32> to vector<8x1xf32>
    %46 = vector.extract_strided_slice %8 {offsets = [6, 0], sizes = [1, 256], strides = [1, 1]} : vector<8x256xf32> to vector<1x256xf32>
    %47 = vector.broadcast %45 : vector<8x1xf32> to vector<8x256xf32>
    %48 = vector.broadcast %46 : vector<1x256xf32> to vector<8x256xf32>
    %49 = arith.mulf %47, %48 : vector<8x256xf32>
    %50 = arith.addf %44, %49 : vector<8x256xf32>
    %51 = vector.extract_strided_slice %9 {offsets = [0, 7], sizes = [8, 1], strides = [1, 1]} : vector<8x8xf32> to vector<8x1xf32>
    %52 = vector.extract_strided_slice %8 {offsets = [7, 0], sizes = [1, 256], strides = [1, 1]} : vector<8x256xf32> to vector<1x256xf32>
    %53 = vector.broadcast %51 : vector<8x1xf32> to vector<8x256xf32>
    %54 = vector.broadcast %52 : vector<1x256xf32> to vector<8x256xf32>
    %55 = arith.mulf %53, %54 : vector<8x256xf32>
    %56 = arith.addf %50, %55 : vector<8x256xf32>
    %c0_9 = arith.constant 0 : index
    %c0_10 = arith.constant 0 : index
    %57 = vector.load %arg5[%c0_9, %c0_10] : memref<8x1xf32, #tpu.memory_space<vmem>>, vector<8x1xf32>
    %58 = vector.broadcast %57 : vector<8x1xf32> to vector<8x256xf32>
    %59 = arith.addf %56, %58 : vector<8x256xf32>
    %c0_11 = arith.constant 0 : index
    %c0_12 = arith.constant 0 : index
    %c0_13 = arith.constant 0 : index
    %60 = vector.load %arg6[%c0_11, %c0_12, %c0_13] : memref<1x8x256xf32, #tpu.memory_space<vmem>>, vector<1x8x256xf32>
    %61 = vector.shape_cast %60 : vector<1x8x256xf32> to vector<8x256xf32>
    %62 = vector.shape_cast %59 : vector<8x256xf32> to vector<1x8x256xf32>
    tpu.vector_store %arg6[%c0_11, %c0_12, %c0_13], %62 {strides = array<i32>} : memref<1x8x256xf32, #tpu.memory_space<vmem>>, vector<1x8x256xf32>,
    return
  }
  func.func @transform_0(%arg0: i32) -> (i32, i32, i32) {
    %c0_i32 = arith.constant 0 : i32
    %c0_i32_0 = arith.constant 0 : i32
    %c0_i32_1 = arith.constant 0 : i32
    return %arg0, %c0_i32, %c0_i32_0 : i32, i32, i32
  }
  func.func @transform_1(%arg0: i32) -> (i32, i32) {
    %c0_i32 = arith.constant 0 : i32
    %c0_i32_0 = arith.constant 0 : i32
    %c0_i32_1 = arith.constant 0 : i32
    return %c0_i32, %c0_i32_0 : i32, i32
  }
  func.func @transform_2(%arg0: i32) -> (i32, i32) {
    %c0_i32 = arith.constant 0 : i32
    %c0_i32_0 = arith.constant 0 : i32
    %c0_i32_1 = arith.constant 0 : i32
    return %c0_i32, %c0_i32_0 : i32, i32
  }
  func.func @transform_3(%arg0: i32) -> (i32, i32) {
    %c0_i32 = arith.constant 0 : i32
    %c0_i32_0 = arith.constant 0 : i32
    %c0_i32_1 = arith.constant 0 : i32
    return %c0_i32, %c0_i32_0 : i32, i32
  }
  func.func @transform_4(%arg0: i32) -> (i32, i32) {
    %c0_i32 = arith.constant 0 : i32
    %c0_i32_0 = arith.constant 0 : i32
    %c0_i32_1 = arith.constant 0 : i32
    return %c0_i32, %c0_i32_0 : i32, i32
  }
  func.func @transform_5(%arg0: i32) -> (i32, i32, i32) {
    %c0_i32 = arith.constant 0 : i32
    %c0_i32_0 = arith.constant 0 : i32
    %c0_i32_1 = arith.constant 0 : i32
    return %arg0, %c0_i32, %c0_i32_0 : i32, i32, i32
  }
}

</mosaic_0001>

<llo_original>
// kernel: _lambda_.1
$region0: #{_lambda_.1}
  #allocation0 [shape = 'u32[]', space=smem, size = 0x4, offset = 0x4, fixed_abs, tag = 'smem constant byte address 0x4 - core index']
  #allocation1 [shape = 'u32[144,128]{1,0:T(1,128)}', space=vmem, size = 0x12000, scoped, tag = 'internal scratch']
  %s0 = inlined_call_operand.vmem [shape: f32[2,36,256], index: 0, kind: input, shape index: {}]
  %s1 = inlined_call_operand.vmem [shape: f32[8,36], index: 1, kind: input, shape index: {}]
  %s2 = inlined_call_operand.vmem [shape: f32[8,1], index: 2, kind: input, shape index: {}]
  %s3 = inlined_call_operand.vmem [shape: f32[8,8], index: 3, kind: input, shape index: {}]
  %s4 = inlined_call_operand.vmem [shape: f32[8,1], index: 4, kind: input, shape index: {}]
  %s5 = inlined_call_operand.vmem [shape: f32[2,8,256], index: 5, kind: output, shape index: {}]
  %s6 = sld [smem:[#allocation0]]
  $region53: #{_lambda_.1} parent=0
    _
  %s8 = ssub.s32 1, %s6
  %s9 = scalar_select 0, %s8, %s6
  loop: start=0, step=1, limit=4
  $region2: #{_lambda_.1} parent=0 // loop_pre_header
    _
  $region3: #{_lambda_.1} parent=0 // loop_header
    %s11 = sphi 0, %s15
    %p12 = scmp.ge.s32.totalorder %s11, 4
    %s21 = sphi 0, %s23
    %s24 = sphi 0, %s21
    %s25 = sphi 0, %s24
    %s41 = sphi 0, %s25
    %s45 = sphi 0, %s45
    %s47 = sphi 0, %s45
    %s48 = sphi 0, %s47
    %s62 = sphi 0, %s48
    %s66 = sphi 0, %s66
    %s68 = sphi 0, %s66
    %s69 = sphi 0, %s68
    %s83 = sphi 0, %s69
    %s87 = sphi 0, %s87
    %s89 = sphi 0, %s87
    %s90 = sphi 0, %s89
    %s104 = sphi 0, %s90
    %s108 = sphi 0, %s108
    %s110 = sphi 0, %s108
    %s111 = sphi 0, %s110
    %s125 = sphi 0, %s111
    %s131 = sphi 0, %s133
    %s134 = sphi 0, %s131
    %s135 = sphi 0, %s134
    %s151 = sphi 0, %s135
  $region4: #{_lambda_.1} parent=0 // loop_header_branch
    %14 = sbr.rel (%p12) target = $region8
  $region5: #{_lambda_.1} parent=0 // loop_body
    %s16 = ssub.s32 %s11, 1
    %s17 = ssub.s32 %s11, 2
    %s18 = sadd.s32 %s11, 1
    %s19 = ssub.s32 %s11, %s18
    %p20 = scmp.eq.s32.totalorder %s19, 0
    %s22 = sadd.s32 %s21, 1
    %s23 = scalar_select %p20, %s21, %s22
    %p26 = pneg %p20
    %p27 = scmp.eq.s32.totalorder %s11, 1
    %p28 = por %p26, %p27
    %p29 = scmp.ne.s32.totalorder %s21, %s24
    %p30 = scmp.eq.s32.totalorder %s11, 0
    %p31 = por %p29, %p30
    %p32 = scmp.ne.s32.totalorder %s21, %s24
    %p33 = scmp.eq.s32.totalorder %s16, 1
    %p34 = por %p32, %p33
    %p35 = scmp.ne.s32.totalorder %s24, %s25
    %p36 = scmp.eq.s32.totalorder %s16, 0
    %p37 = por %p35, %p36
    %p38 = scmp.ne.s32.totalorder %s24, %s25
    %p39 = scmp.eq.s32.totalorder %s17, 1
    %p40 = por %p38, %p39
    %p42 = scmp.ne.s32.totalorder %s25, %s41
    %p43 = scmp.eq.s32.totalorder %s17, 0
    %p44 = por %p42, %p43
    %s46 = sadd.s32 %s45, 1
    %p49 = scmp.eq.s32.totalorder %s11, 1
    %p50 = scmp.ne.s32.totalorder %s45, %s47
    %p51 = scmp.eq.s32.totalorder %s11, 0
    %p52 = por %p50, %p51
    %p53 = scmp.ne.s32.totalorder %s45, %s47
    %p54 = scmp.eq.s32.totalorder %s16, 1
    %p55 = por %p53, %p54
    %p56 = scmp.ne.s32.totalorder %s47, %s48
    %p57 = scmp.eq.s32.totalorder %s16, 0
    %p58 = por %p56, %p57
    %p59 = scmp.ne.s32.totalorder %s47, %s48
    %p60 = scmp.eq.s32.totalorder %s17, 1
    %p61 = por %p59, %p60
    %p63 = scmp.ne.s32.totalorder %s48, %s62
    %p64 = scmp.eq.s32.totalorder %s17, 0
    %p65 = por %p63, %p64
    %s67 = sadd.s32 %s66, 1
    %p70 = scmp.eq.s32.totalorder %s11, 1
    %p71 = scmp.ne.s32.totalorder %s66, %s68
    %p72 = scmp.eq.s32.totalorder %s11, 0
    %p73 = por %p71, %p72
    %p74 = scmp.ne.s32.totalorder %s66, %s68
    %p75 = scmp.eq.s32.totalorder %s16, 1
    %p76 = por %p74, %p75
    %p77 = scmp.ne.s32.totalorder %s68, %s69
    %p78 = scmp.eq.s32.totalorder %s16, 0
    %p79 = por %p77, %p78
    %p80 = scmp.ne.s32.totalorder %s68, %s69
    %p81 = scmp.eq.s32.totalorder %s17, 1
    %p82 = por %p80, %p81
    %p84 = scmp.ne.s32.totalorder %s69, %s83
    %p85 = scmp.eq.s32.totalorder %s17, 0
    %p86 = por %p84, %p85
    %s88 = sadd.s32 %s87, 1
    %p91 = scmp.eq.s32.totalorder %s11, 1
    %p92 = scmp.ne.s32.totalorder %s87, %s89
    %p93 = scmp.eq.s32.totalorder %s11, 0
    %p94 = por %p92, %p93
    %p95 = scmp.ne.s32.totalorder %s87, %s89
    %p96 = scmp.eq.s32.totalorder %s16, 1
    %p97 = por %p95, %p96
    %p98 = scmp.ne.s32.totalorder %s89, %s90
    %p99 = scmp.eq.s32.totalorder %s16, 0
    %p100 = por %p98, %p99
    %p101 = scmp.ne.s32.totalorder %s89, %s90
    %p102 = scmp.eq.s32.totalorder %s17, 1
    %p103 = por %p101, %p102
    %p105 = scmp.ne.s32.totalorder %s90, %s104
    %p106 = scmp.eq.s32.totalorder %s17, 0
    %p107 = por %p105, %p106
    %s109 = sadd.s32 %s108, 1
    %p112 = scmp.eq.s32.totalorder %s11, 1
    %p113 = scmp.ne.s32.totalorder %s108, %s110
    %p114 = scmp.eq.s32.totalorder %s11, 0
    %p115 = por %p113, %p114
    %p116 = scmp.ne.s32.totalorder %s108, %s110
    %p117 = scmp.eq.s32.totalorder %s16, 1
    %p118 = por %p116, %p117
    %p119 = scmp.ne.s32.totalorder %s110, %s111
    %p120 = scmp.eq.s32.totalorder %s16, 0
    %p121 = por %p119, %p120
    %p122 = scmp.ne.s32.totalorder %s110, %s111
    %p123 = scmp.eq.s32.totalorder %s17, 1
    %p124 = por %p122, %p123
    %p126 = scmp.ne.s32.totalorder %s111, %s125
    %p127 = scmp.eq.s32.totalorder %s17, 0
    %p128 = por %p126, %p127
    %s129 = ssub.s32 %s11, %s18
    %p130 = scmp.eq.s32.totalorder %s129, 0
    %s132 = sadd.s32 %s131, 1
    %s133 = scalar_select %p130, %s131, %s132
    %p136 = pneg %p130
    %p137 = scmp.eq.s32.totalorder %s11, 1
    %p138 = por %p136, %p137
    %p139 = scmp.ne.s32.totalorder %s131, %s134
    %p140 = scmp.eq.s32.totalorder %s11, 0
    %p141 = por %p139, %p140
    %p142 = scmp.ne.s32.totalorder %s131, %s134
    %p143 = scmp.eq.s32.totalorder %s16, 1
    %p144 = por %p142, %p143
    %p145 = scmp.ne.s32.totalorder %s134, %s135
    %p146 = scmp.eq.s32.totalorder %s16, 0
    %p147 = por %p145, %p146
    %p148 = scmp.ne.s32.totalorder %s134, %s135
    %p149 = scmp.eq.s32.totalorder %s17, 1
    %p150 = por %p148, %p149
    %p152 = scmp.ne.s32.totalorder %s135, %s151
    %p153 = scmp.eq.s32.totalorder %s17, 0
    %p154 = por %p152, %p153
    %p155 = scmp.le.s32.totalorder 1, %s11
    %p156 = scmp.lt.s32.totalorder %s11, 3
    %p157 = pnand %p155, %p156
    %p158 = pneg %p157
    // Predicated region
    $region9: #{_lambda_.1} parent=5 // pred_check
      _
    $region10: #{_lambda_.1} parent=5 // pred_check_branch
      %160 = sbr.rel (%p157) target = $region12
    $region11: #{_lambda_.1} parent=5 // pred_region
      %s161 = ssub.s32 %s11, 1
      // Predicated region
      $region13: #{_lambda_.1} parent=11 // pred_check
        %p162 = pneg %p58
      $region14: #{_lambda_.1} parent=11 // pred_check_branch
        %164 = sbr.rel (%p162) target = $region16
      $region15: #{_lambda_.1} parent=11 // pred_region
        _
      $region16: #{_lambda_.1} parent=11 // pred_fallthru
        _
      // Predicated region
      $region17: #{_lambda_.1} parent=11 // pred_check
        %p165 = pneg %p79
      $region18: #{_lambda_.1} parent=11 // pred_check_branch
        %167 = sbr.rel (%p165) target = $region20
      $region19: #{_lambda_.1} parent=11 // pred_region
        _
      $region20: #{_lambda_.1} parent=11 // pred_fallthru
        _
      // Predicated region
      $region21: #{_lambda_.1} parent=11 // pred_check
        %p168 = pneg %p100
      $region22: #{_lambda_.1} parent=11 // pred_check_branch
        %170 = sbr.rel (%p168) target = $region24
      $region23: #{_lambda_.1} parent=11 // pred_region
        _
      $region24: #{_lambda_.1} parent=11 // pred_fallthru
        _
      // Predicated region
      $region25: #{_lambda_.1} parent=11 // pred_check
        %p171 = pneg %p121
      $region26: #{_lambda_.1} parent=11 // pred_check_branch
        %173 = sbr.rel (%p171) target = $region28
      $region27: #{_lambda_.1} parent=11 // pred_region
        _
      $region28: #{_lambda_.1} parent=11 // pred_fallthru
        _
    $region12: #{_lambda_.1} parent=5 // pred_fallthru
      _
    %p174 = scmp.lt.s32.totalorder %s11, 2
    // Predicated region
    $region29: #{_lambda_.1} parent=5 // pred_check
      %p175 = pneg %p174
    $region30: #{_lambda_.1} parent=5 // pred_check_branch
      %177 = sbr.rel (%p175) target = $region32
    $region31: #{_lambda_.1} parent=5 // pred_region
      // Predicated region
      $region33: #{_lambda_.1} parent=31 // pred_check
        %p178 = pneg %p31
      $region34: #{_lambda_.1} parent=31 // pred_check_branch
        %180 = sbr.rel (%p178) target = $region36
      $region35: #{_lambda_.1} parent=31 // pred_region
        %p181 = scmp.lt.s32.totalorder %s11, 1
        %s182 = scalar_select %p181, %s11, 1
        %s183 = smul.addr %s182, 10
        %s184 = smul.addr %s183, 8
        %s185 = scalar_lea.vmem %s0, %s184
      $region36: #{_lambda_.1} parent=31 // pred_fallthru
        _
    $region32: #{_lambda_.1} parent=5 // pred_fallthru
      _
    %p186 = scmp.le.s32.totalorder 1, %s11
    %p187 = scmp.lt.s32.totalorder %s11, 3
    %p188 = pnand %p186, %p187
    %p189 = pneg %p188
    // Predicated region
    $region37: #{_lambda_.1} parent=5 // pred_check
      _
    $region38: #{_lambda_.1} parent=5 // pred_check_branch
      %191 = sbr.rel (%p188) target = $region40
    $region39: #{_lambda_.1} parent=5 // pred_region
      %s192 = ssub.s32 %s11, 1
      %p193 = scmp.lt.s32.totalorder %s16, 1
      %s194 = scalar_select %p193, %s16, 1
      %s195 = smul.addr %s194, 10
      %s196 = smul.addr %s195, 8
      %s197 = scalar_lea.vmem %s0, %s196
      %p198 = pneg %p37
      %p199 = pneg %p34
      %p200 = pneg %p58
      %p201 = pneg %p55
      %p202 = pneg %p79
      %p203 = pneg %p76
      %p204 = pneg %p100
      %p205 = pneg %p97
      %p206 = pneg %p121
      %p207 = pneg %p118
      %p208 = pneg %p147
      %p209 = pneg %p144
      %p210 = scmp.lt.s32.totalorder %s16, 1
      %s211 = scalar_select %p210, %s16, 1
      %s212 = smul.addr %s211, 2
      %s213 = smul.addr %s212, 8
      %s214 = scalar_lea.vmem %s5, %s213
      %p215 = scmp.lt.s32.totalorder %s16, 1
      %s216 = scalar_select %p215, %s16, 1
      %s217 = smul.addr %s216, 10
      %s218 = smul.addr %s217, 8
      %s219 = scalar_lea.vmem %s0, %s218
      %p220 = scmp.lt.s32.totalorder %s16, 1
      %s221 = scalar_select %p220, %s16, 1
      %s222 = smul.addr %s221, 2
      %s223 = smul.addr %s222, 8
      %s224 = scalar_lea.vmem %s5, %s223
      %v225 = vld [vmem:[%s1] sm:$0xff]
      %v226 = vld [vmem:[%s219] sm:$0xff]
      %v227 = vld [vmem:[%s219 + $0x8] sm:$0xff]
      %v228 = vld [vmem:[%s219 + $0x10] sm:$0xff]
      %v229 = vld [vmem:[%s219 + $0x18] sm:$0xff]
      %v230 = vld [vmem:[%s219 + $0x20] sm:$0xff]
      %v231 = vld [vmem:[%s219 + $0x28] sm:$0xff]
      %v232 = vld [vmem:[%s219 + $0x30] sm:$0xff]
      %v233 = vld [vmem:[%s219 + $0x38] sm:$0xff]
      %v234 = vld [vmem:[%s219 + $0x40] sm:$0xf]
      %v235 = vld [vmem:[%s219 + $0x48] sm:$0xf]
      %v236 = vld [vmem:[%s2] sm:$0xff]
      %238 = vset.pattern.permute.xlu0 0
      %239 = vperm.xlu0 %238, %v236
      %v240 = vpop.permute.xlu0 %239
      %vm242 = vcmask 293888
      %v244 = vsel %vm242, %v225, 0
      %vm246 = vcmask 1043456
      %v248 = vsel %vm246, %v234, 0
      %v251 = vsel %vm246, %v235, 0
      %253 = vmatprep.subr.mxu0 %v227
      %254 = vmatpush1.msra.mxu0 %v226
      %255 = vmatprep.subr.mxu0 %v229
      %256 = vmatpush1.msra.mxu0 %v228
      %257 = vmatprep.subr.mxu0 %v231
      %258 = vmatpush1.msra.mxu0 %v230
      %259 = vmatprep.subr.mxu0 %v233
      %260 = vmatpush1.msra.mxu0 %v232
      %261 = vmatprep.subr.mxu0 %v251
      %262 = vmatpush1.msra.mxu0 %v248
      %263 = vmatprep.subr.mxu0 0.0
      %264 = vmatpush1.msra.mxu0 0.0
      %265 = vmatprep.subr.mxu0 0.0
      %266 = vmatpush1.msra.mxu0 0.0
      %267 = vmatprep.subr.mxu0 0.0
      %268 = vmatpush1.msra.mxu0 0.0
      %269 = vmatprep.subr.mxu0 0.0
      %270 = vmatpush1.msra.mxu0 0.0
      %271 = vmatprep.subr.mxu0 0.0
      %272 = vmatpush1.msra.mxu0 0.0
      %273 = vmatprep.subr.mxu0 0.0
      %274 = vmatpush1.msra.mxu0 0.0
      %275 = vmatprep.subr.mxu0 0.0
      %276 = vmatpush1.msra.mxu0 0.0
      %277 = vmatprep.subr.mxu0 0.0
      %278 = vmatpush1.msra.mxu0 0.0
      %279 = vmatprep.subr.mxu0 0.0
      %280 = vmatpush1.msra.mxu0 0.0
      %281 = vmatprep.subr.mxu0 0.0
      %282 = vmatpush1.msra.mxu0 0.0
      %283 = vmatprep.subr.mxu0 0.0
      %284 = vmatpush1.msra.mxu0 0.0
      %285 = vmatprep.subr.mxu0 0.0
      %286 = vmatpush1.msra.mxu0 0.0
      %287 = vmatprep.subr.mxu0 0.0
      %288 = vmatpush1.msra.mxu0 0.0
      %289 = vmatprep.subr.mxu0 0.0
      %290 = vmatpush1.msra.mxu0 0.0
      %291 = vmatprep.subr.mxu0 0.0
      %292 = vmatpush1.msra.mxu0 0.0
      %293 = vmatprep.subr.mxu0 0.0
      %294 = vmatpush1.msra.mxu0 0.0
      %295 = vmatprep.subr.mxu0 0.0
      %296 = vmatpush1.msra.mxu0 0.0
      %297 = vmatprep.subr.mxu0 0.0
      %298 = vmatpush1.msra.mxu0 0.0
      %299 = vmatprep.subr.mxu0 0.0
      %300 = vmatpush1.msra.mxu0 0.0
      %301 = vmatprep.subr.mxu0 0.0
      %302 = vmatpush1.msra.mxu0 0.0
      %303 = vmatprep.subr.mxu0 0.0
      %304 = vmatpush1.msra.mxu0 0.0
      %305 = vmatprep.subr.mxu0 0.0
      %306 = vmatpush1.msra.mxu0 0.0
      %307 = vmatprep.subr.mxu0 0.0
      %308 = vmatpush1.msra.mxu0 0.0
      %309 = vmatprep.subr.mxu0 0.0
      %310 = vmatpush1.msra.mxu0 0.0
      %311 = vmatprep.subr.mxu0 0.0
      %312 = vmatpush1.msra.mxu0 0.0
      %313 = vmatprep.subr.mxu0 0.0
      %314 = vmatpush1.msra.mxu0 0.0
      %315 = vmatprep.subr.mxu0 0.0
      %316 = vmatpush1.msra.mxu0 0.0
      %317 = vmatprep.mubr.f32.mxu0 0.0
      %318 = vmatmul.mubr.f32.gmra.mrb[0].mxu0 %v244
      %v319 = vpop.f32.mrb[0].mxu0
      %v320 = vadd.f32 %v240, %v319
      %v321 = vpop.f32.mrb[0].mxu0
      %v322 = vadd.f32 %v240, %v321
      %323 = vdwg.mxu0
      %v324 = vmax.f32 %v320, 0.0
      %v325 = vmax.f32 %v322, 0.0
      %v326 = vld [vmem:[%s3] sm:$0xff]
      %328 = vset.pattern.permute.xlu0 0
      %329 = vperm.xlu0 %328, %v326
      %v330 = vpop.permute.xlu0 %329
      %v332 = vlaneseq
      %v333 = vshrl.u32 %v332, 7
      %v334 = vsub.s32 0, %v333
      %v335 = vrot.slane %v324, %v334
      %v336 = vlaneseq
      %v337 = vshrl.u32 %v336, 7
      %v338 = vsub.s32 0, %v337
      %v339 = vrot.slane %v325, %v338
      %v340 = vmul.f32 %v330, %v335
      %v341 = vmul.f32 %v330, %v339
      %342 = vset.pattern.permute.xlu0 1
      %343 = vperm.xlu0 %342, %v326
      %v344 = vpop.permute.xlu0 %343
      %v346 = vlaneseq
      %v347 = vshrl.u32 %v346, 7
      %v348 = vsub.s32 1, %v347
      %v349 = vrot.slane %v324, %v348
      %v350 = vlaneseq
      %v351 = vshrl.u32 %v350, 7
      %v352 = vsub.s32 1, %v351
      %v353 = vrot.slane %v325, %v352
      %v354 = vmul.f32 %v344, %v349
      %v355 = vmul.f32 %v344, %v353
      %v356 = vadd.f32 %v340, %v354
      %v357 = vadd.f32 %v341, %v355
      %358 = vset.pattern.permute.xlu0 2
      %359 = vperm.xlu0 %358, %v326
      %v360 = vpop.permute.xlu0 %359
      %v362 = vlaneseq
      %v363 = vshrl.u32 %v362, 7
      %v364 = vsub.s32 2, %v363
      %v365 = vrot.slane %v324, %v364
      %v366 = vlaneseq
      %v367 = vshrl.u32 %v366, 7
      %v368 = vsub.s32 2, %v367
      %v369 = vrot.slane %v325, %v368
      %v370 = vmul.f32 %v360, %v365
      %v371 = vmul.f32 %v360, %v369
      %v372 = vadd.f32 %v356, %v370
      %v373 = vadd.f32 %v357, %v371
      %374 = vset.pattern.permute.xlu0 3
      %375 = vperm.xlu0 %374, %v326
      %v376 = vpop.permute.xlu0 %375
      %v378 = vlaneseq
      %v379 = vshrl.u32 %v378, 7
      %v380 = vsub.s32 3, %v379
      %v381 = vrot.slane %v324, %v380
      %v382 = vlaneseq
      %v383 = vshrl.u32 %v382, 7
      %v384 = vsub.s32 3, %v383
      %v385 = vrot.slane %v325, %v384
      %v386 = vmul.f32 %v376, %v381
      %v387 = vmul.f32 %v376, %v385
      %v388 = vadd.f32 %v372, %v386
      %v389 = vadd.f32 %v373, %v387
      %390 = vset.pattern.permute.xlu0 4
      %391 = vperm.xlu0 %390, %v326
      %v392 = vpop.permute.xlu0 %391
      %v394 = vlaneseq
      %v395 = vshrl.u32 %v394, 7
      %v396 = vsub.s32 4, %v395
      %v397 = vrot.slane %v324, %v396
      %v398 = vlaneseq
      %v399 = vshrl.u32 %v398, 7
      %v400 = vsub.s32 4, %v399
      %v401 = vrot.slane %v325, %v400
      %v402 = vmul.f32 %v392, %v397
      %v403 = vmul.f32 %v392, %v401
      %v404 = vadd.f32 %v388, %v402
      %v405 = vadd.f32 %v389, %v403
      %406 = vset.pattern.permute.xlu0 5
      %407 = vperm.xlu0 %406, %v326
      %v408 = vpop.permute.xlu0 %407
      %v410 = vlaneseq
      %v411 = vshrl.u32 %v410, 7
      %v412 = vsub.s32 5, %v411
      %v413 = vrot.slane %v324, %v412
      %v414 = vlaneseq
      %v415 = vshrl.u32 %v414, 7
      %v416 = vsub.s32 5, %v415
      %v417 = vrot.slane %v325, %v416
      %v418 = vmul.f32 %v408, %v413
      %v419 = vmul.f32 %v408, %v417
      %v420 = vadd.f32 %v404, %v418
      %v421 = vadd.f32 %v405, %v419
      %422 = vset.pattern.permute.xlu0 6
      %423 = vperm.xlu0 %422, %v326
      %v424 = vpop.permute.xlu0 %423
      %v426 = vlaneseq
      %v427 = vshrl.u32 %v426, 7
      %v428 = vsub.s32 6, %v427
      %v429 = vrot.slane %v324, %v428
      %v430 = vlaneseq
      %v431 = vshrl.u32 %v430, 7
      %v432 = vsub.s32 6, %v431
      %v433 = vrot.slane %v325, %v432
      %v434 = vmul.f32 %v424, %v429
      %v435 = vmul.f32 %v424, %v433
      %v436 = vadd.f32 %v420, %v434
      %v437 = vadd.f32 %v421, %v435
      %438 = vset.pattern.permute.xlu0 7
      %439 = vperm.xlu0 %438, %v326
      %v440 = vpop.permute.xlu0 %439
      %v442 = vlaneseq
      %v443 = vshrl.u32 %v442, 7
      %v444 = vsub.s32 7, %v443
      %v445 = vrot.slane %v324, %v444
      %v446 = vlaneseq
      %v447 = vshrl.u32 %v446, 7
      %v448 = vsub.s32 7, %v447
      %v449 = vrot.slane %v325, %v448
      %v450 = vmul.f32 %v440, %v445
      %v451 = vmul.f32 %v440, %v449
      %v452 = vadd.f32 %v436, %v450
      %v453 = vadd.f32 %v437, %v451
      %v454 = vld [vmem:[%s4] sm:$0xff]
      %456 = vset.pattern.permute.xlu0 0
      %457 = vperm.xlu0 %456, %v454
      %v458 = vpop.permute.xlu0 %457
      %v460 = vadd.f32 %v452, %v458
      %v461 = vadd.f32 %v453, %v458
      %462 = vst [vmem:[%s224] sm:$0xff] %v460
      %463 = vst [vmem:[%s224 + $0x8] sm:$0xff] %v461
      %p464 = scmp.lt.s32.totalorder %s16, 1
      %s465 = scalar_select %p464, %s16, 1
      %s466 = smul.addr %s465, 2
      %s467 = smul.addr %s466, 8
      %s468 = scalar_lea.vmem %s5, %s467
      // Predicated region
      $region41: #{_lambda_.1} parent=39 // pred_check
        %p469 = pneg %p144
      $region42: #{_lambda_.1} parent=39 // pred_check_branch
        %471 = sbr.rel (%p469) target = $region44
      $region43: #{_lambda_.1} parent=39 // pred_region
        _
      $region44: #{_lambda_.1} parent=39 // pred_fallthru
        _
    $region40: #{_lambda_.1} parent=5 // pred_fallthru
      _
    %p472 = scmp.le.s32.totalorder 2, %s11
    // Predicated region
    $region45: #{_lambda_.1} parent=5 // pred_check
      %p473 = pneg %p472
    $region46: #{_lambda_.1} parent=5 // pred_check_branch
      %475 = sbr.rel (%p473) target = $region48
    $region47: #{_lambda_.1} parent=5 // pred_region
      %s476 = ssub.s32 %s11, 2
      // Predicated region
      $region49: #{_lambda_.1} parent=47 // pred_check
        %p477 = pneg %p150
      $region50: #{_lambda_.1} parent=47 // pred_check_branch
        %479 = sbr.rel (%p477) target = $region52
      $region51: #{_lambda_.1} parent=47 // pred_region
        %p480 = scmp.lt.s32.totalorder %s17, 1
        %s481 = scalar_select %p480, %s17, 1
        %s482 = smul.addr %s481, 2
        %s483 = smul.addr %s482, 8
        %s484 = scalar_lea.vmem %s5, %s483
      $region52: #{_lambda_.1} parent=47 // pred_fallthru
        _
    $region48: #{_lambda_.1} parent=5 // pred_fallthru
      _
  $region6: #{_lambda_.1} parent=0 // loop_footer
    %s15 = sadd.s32 1, %s11
  $region7: #{_lambda_.1} parent=0 // loop_footer_branch
    %10 = sbr.rel target = $region3
  $region8: #{_lambda_.1} parent=0 // loop_exit
    _

</llo_original>
